<compile_context>
chip_gen: v5e
topology: v5e:2x2
jax: 0.10.0
libtpu: 0.0.40
codegen_flags: <defaults>
</compile_context>

<pallas_src>
import jax
import jax.numpy as jnp
from jax.experimental import pallas as pl
from jax.experimental.pallas import tpu as pltpu

_LANE = 128


def _round_up(x, m):
    return ((x + m - 1) // m) * m


def cross_layer_kernel(x0_ref, xi_ref, wt_ref, b_ref, o_ref):
    # Single VMEM->vreg load per activation tile.
    xi = xi_ref[...]
    x0 = x0_ref[...]

    # Linear: xi @ W^T + b. wt_ref already holds W^T in bf16 (prepared once);
    # MXU operands in bf16, accumulation in f32.
    lin = jnp.dot(
        xi.astype(jnp.bfloat16),
        wt_ref[...],
        preferred_element_type=jnp.float32,
    )
    lin = lin + b_ref[...]  # (1, D) f32 bias row broadcasts over the tile.

    # Cross interaction + residual in f32 vregs (v5e VPU has no bf16 path).
    out = x0.astype(jnp.float32) * lin + xi.astype(jnp.float32)
    o_ref[...] = out.astype(o_ref.dtype)


def prepare_cross_layer_params(weight, bias):
    """One-time parameter preparation (do at init, NOT per call).

    weight: (D, D) nn.Linear convention (out_features, in_features); bias (D,).
    Returns (wt_bf16, bias_row) with the feature dim zero-padded up to a
    multiple of 128 (lane-dense stores); padding is exact for this op since
    padded columns stay identically zero through x0 * lin + xi.
    """
    D = weight.shape[0]
    assert weight.shape == (D, D) and bias.shape == (D,)
    D_pad = _round_up(D, _LANE)
    wt = jnp.asarray(weight, jnp.float32).T  # (in, out)
    wt = jnp.pad(wt, ((0, D_pad - D), (0, D_pad - D))).astype(jnp.bfloat16)
    b_row = jnp.pad(jnp.asarray(bias, jnp.float32), (0, D_pad - D)).reshape(1, D_pad)
    return wt, b_row


def _vmem_need_bytes(tb, d_pad, act_itemsize):
    # x0 + xi + out tiles (double-buffered by the pipeline) + single-buffered
    # bf16 weight + f32 bias row.
    return 2 * 3 * tb * d_pad * act_itemsize + d_pad * d_pad * 2 + d_pad * 4


def _choose_batch_tile(B, d_pad, act_itemsize, tb_req, vmem_budget):
    if B <= 8:
        return B
    # Guarantee >= 2 grid steps so the 'parallel' axis can shard across both
    # v7x TensorCores; on v5e/v6e the extra ~0.35us/step is negligible.
    tb = min(tb_req, _round_up(pl.cdiv(B, 2), 8))
    tb = max(8, (tb // 8) * 8)
    # Shrink until the double-buffered activation tiles + resident weight fit.
    while tb > 8 and _vmem_need_bytes(tb, d_pad, act_itemsize) > vmem_budget:
        tb = max(8, ((tb // 2) // 8) * 8)
    return tb


def cross_layer(x0, xi, wt_bf16, bias_row, *, tb=1024, vmem_budget_bytes=40 << 20):
    """DCN-v2 cross layer forward.

    x0, xi:    (B, D) activations (same shape/dtype; bf16 inputs also work and
               roughly halve HBM traffic — the kernel is bandwidth bound)
    wt_bf16:   (D_pad, D_pad) pre-transposed, pre-cast, pre-padded weight
    bias_row:  (1, D_pad) f32 bias row
    Returns (B, D) in x0.dtype.
    """
    assert x0.shape == xi.shape and x0.dtype == xi.dtype
    B, D = x0.shape
    D_pad = wt_bf16.shape[0]
    assert wt_bf16.shape == (D_pad, D_pad) and bias_row.shape == (1, D_pad)
    assert D_pad >= D and D_pad % _LANE == 0

    # Zero-pad the feature dim if the model's in_dim isn't 128-aligned.
    if D_pad != D:
        pad = ((0, 0), (0, D_pad - D))
        x0 = jnp.pad(x0, pad)
        xi = jnp.pad(xi, pad)

    itemsize = jnp.dtype(x0.dtype).itemsize
    tb_eff = _choose_batch_tile(B, D_pad, itemsize, tb, vmem_budget_bytes)
    grid = (pl.cdiv(B, tb_eff),)

    # Explicit VMEM limit: scoped defaults (16 MiB v5e / 32 MiB v6e+v7x) are
    # far below physical and would otherwise cap the batch tile.
    need = _vmem_need_bytes(tb_eff, D_pad, itemsize)
    vmem_limit = int(min(max(int(need * 1.25) + (4 << 20), 16 << 20), 60 << 20))

    cost = pl.CostEstimate(
        flops=2 * B * D_pad * D_pad,
        transcendentals=0,
        bytes_accessed=(
            3 * B * D_pad * itemsize        # x0, xi read + out write
            + D_pad * D_pad * 2             # bf16 weight (read once)
            + D_pad * 4                     # bias
        ),
    )

    out = pl.pallas_call(
        cross_layer_kernel,
        out_shape=jax.ShapeDtypeStruct((B, D_pad), x0.dtype),
        grid_spec=pltpu.PrefetchScalarGridSpec(
            num_scalar_prefetch=0,
            grid=grid,
            in_specs=[
                pl.BlockSpec((tb_eff, D_pad), lambda i: (i, 0)),   # x0 tile
                pl.BlockSpec((tb_eff, D_pad), lambda i: (i, 0)),   # xi tile
                # Constant-index blocks: single-buffer (no re-DMA occurs, and
                # a second weight buffer would just burn D*D*2 bytes of VMEM).
                pl.BlockSpec((D_pad, D_pad), lambda i: (0, 0),
                             pipeline_mode=pl.Buffered(1)),        # W^T
                pl.BlockSpec((1, D_pad), lambda i: (0, 0),
                             pipeline_mode=pl.Buffered(1)),        # bias row
            ],
            out_specs=pl.BlockSpec((tb_eff, D_pad), lambda i: (i, 0)),
        ),
        compiler_params=pltpu.CompilerParams(
            dimension_semantics=("parallel",),
            vmem_limit_bytes=vmem_limit,
        ),
        cost_estimate=cost,
    )(x0, xi, wt_bf16, bias_row)

    return out if D_pad == D else out[:, :D]


if __name__ == "__main__":
    key = jax.random.PRNGKey(0)
    # Small demo shapes; D is 128-aligned (lane-dense stores), B > tile so the
    # 'parallel' grid has >= 2 steps.
    B, D = 256, 128

    k_x0, k_xi, k_w, k_b = jax.random.split(key, 4)
    x0 = jax.random.normal(k_x0, (B, D), dtype=jnp.float32)
    xi = jax.random.normal(k_xi, (B, D), dtype=jnp.float32)
    # nn.Linear-shaped params: weight (D, D) = (out, in), bias (D,)
    weight = jax.random.normal(k_w, (D, D), dtype=jnp.float32) / jnp.sqrt(D)
    bias = jax.random.normal(k_b, (D,), dtype=jnp.float32) * 0.01

    # One-time param prep (hoisted transpose + bf16 cast + 128-pad).
    wt_bf16, bias_row = prepare_cross_layer_params(weight, bias)

    out = jax.block_until_ready(cross_layer(x0, xi, wt_bf16, bias_row))

    # Pure-JAX f32 reference; tolerance covers the bf16 MXU operands
    # (accumulation is f32, so relative error stays ~0.5%).
    ref = x0 * (xi @ weight.T + bias) + xi
    assert out.shape == ref.shape and out.dtype == ref.dtype
    assert jnp.allclose(out, ref, atol=5e-2, rtol=2e-2), "mismatch vs reference"

    print("KERNEL_OK")
</pallas_src>

<mosaic_0001>
module attributes {stable_mosaic.version = 11 : i64} {
  func.func @cross_layer_kernel(%arg0: i32, %arg1: memref<128x128xf32, #tpu.memory_space<vmem>>, %arg2: memref<128x128xf32, #tpu.memory_space<vmem>>, %arg3: memref<128x128xbf16, #tpu.memory_space<vmem>>, %arg4: memref<1x128xf32, #tpu.memory_space<vmem>>, %arg5: memref<128x128xf32, #tpu.memory_space<vmem>>) attributes {dimension_semantics = [#tpu.dimension_semantics<parallel>], iteration_bounds = array<i64: 2>, scalar_prefetch = 0 : i64, scratch_operands = 0 : i64, tpu.core_type = #tpu.core_type<tc>, window_params = [{transform_indices = @transform_0, window_bounds = array<i64: 128, 128>}, {transform_indices = @transform_1, window_bounds = array<i64: 128, 128>}, {pipeline_mode = #tpu.pipeline_mode<synchronous>, transform_indices = @transform_2, window_bounds = array<i64: 128, 128>}, {pipeline_mode = #tpu.pipeline_mode<synchronous>, transform_indices = @transform_3, window_bounds = array<i64: 1, 128>}, {transform_indices = @transform_4, window_bounds = array<i64: 128, 128>}]} {
    %c0 = arith.constant 0 : index
    %c0_0 = arith.constant 0 : index
    %0 = vector.load %arg2[%c0, %c0_0] : memref<128x128xf32, #tpu.memory_space<vmem>>, vector<128x128xf32>
    %c0_1 = arith.constant 0 : index
    %c0_2 = arith.constant 0 : index
    %1 = vector.load %arg1[%c0_1, %c0_2] : memref<128x128xf32, #tpu.memory_space<vmem>>, vector<128x128xf32>
    %2 = arith.truncf %0 : vector<128x128xf32> to vector<128x128xbf16>
    %c0_3 = arith.constant 0 : index
    %c0_4 = arith.constant 0 : index
    %3 = vector.load %arg3[%c0_3, %c0_4] : memref<128x128xbf16, #tpu.memory_space<vmem>>, vector<128x128xbf16>
    %cst = arith.constant dense<0.000000e+00> : vector<128x128xf32>
    %4 = tpu.matmul %2, %3, %cst {dimension_numbers = #tpu.dot_dimension_numbers<[1], [0], [0], [1], [0, 0, 1, 1], [], []>} : vector<128x128xbf16>, vector<128x128xbf16>, vector<128x128xf32> -> vector<128x128xf32>
    %c0_5 = arith.constant 0 : index
    %c0_6 = arith.constant 0 : index
    %5 = vector.load %arg4[%c0_5, %c0_6] : memref<1x128xf32, #tpu.memory_space<vmem>>, vector<1x128xf32>
    %6 = vector.broadcast %5 : vector<1x128xf32> to vector<128x128xf32>
    %7 = arith.addf %4, %6 : vector<128x128xf32>
    %8 = arith.mulf %1, %7 : vector<128x128xf32>
    %9 = arith.addf %8, %0 : vector<128x128xf32>
    %c0_7 = arith.constant 0 : index
    %c0_8 = arith.constant 0 : index
    %10 = vector.load %arg5[%c0_7, %c0_8] : memref<128x128xf32, #tpu.memory_space<vmem>>, vector<128x128xf32>
    tpu.vector_store %arg5[%c0_7, %c0_8], %9 {strides = array<i32>} : memref<128x128xf32, #tpu.memory_space<vmem>>, vector<128x128xf32>,
    return
  }
  func.func @transform_0(%arg0: i32) -> (i32, i32) {
    %c0_i32 = arith.constant 0 : i32
    %c0_i32_0 = arith.constant 0 : i32
    return %arg0, %c0_i32 : i32, i32
  }
  func.func @transform_1(%arg0: i32) -> (i32, i32) {
    %c0_i32 = arith.constant 0 : i32
    %c0_i32_0 = arith.constant 0 : i32
    return %arg0, %c0_i32 : i32, i32
  }
  func.func @transform_2(%arg0: i32) -> (i32, i32) {
    %c0_i32 = arith.constant 0 : i32
    %c0_i32_0 = arith.constant 0 : i32
    %c0_i32_1 = arith.constant 0 : i32
    return %c0_i32, %c0_i32_0 : i32, i32
  }
  func.func @transform_3(%arg0: i32) -> (i32, i32) {
    %c0_i32 = arith.constant 0 : i32
    %c0_i32_0 = arith.constant 0 : i32
    %c0_i32_1 = arith.constant 0 : i32
    return %c0_i32, %c0_i32_0 : i32, i32
  }
  func.func @transform_4(%arg0: i32) -> (i32, i32) {
    %c0_i32 = arith.constant 0 : i32
    %c0_i32_0 = arith.constant 0 : i32
    return %arg0, %c0_i32 : i32, i32
  }
}

</mosaic_0001>

<llo_original>
// kernel: tpu_custom_call.1
$region0: #{tpu_custom_call.1}
  #allocation0 [shape = 'u32[]', space=smem, size = 0x4, offset = 0x4, fixed_abs, tag = 'smem constant byte address 0x4 - core index']
  #allocation1 [shape = 'u32[72,128]{1,0:T(1,128)}', space=vmem, size = 0x9000, scoped, tag = 'internal scratch']
  %s0 = inlined_call_operand.hbm [shape: f32[256,128], index: 0, kind: input, shape index: {}]
  %s1 = inlined_call_operand.hbm [shape: f32[256,128], index: 1, kind: input, shape index: {}]
  %s2 = inlined_call_operand.hbm [shape: bf16[128,128], index: 2, kind: input, shape index: {}]
  %s3 = inlined_call_operand.vmem [shape: f32[1,128], index: 3, kind: input, shape index: {}]
  %s4 = inlined_call_operand.hbm [shape: f32[256,128], index: 4, kind: output, shape index: {}]
  %s5 = sld [smem:[#allocation0]]
  $region61: #{tpu_custom_call.1} parent=0
    _
  %s7 = ssub.s32 1, %s5
  %s8 = scalar_select 0, %s7, %s5
  $region1: #{tpu_custom_call.1} parent=0
    #allocation2 [shape = 'u8[131072]{0}', space=vmem, size = 0x20000, scoped, tag = 'input window, operand 0']
    #allocation3 [shape = 's32[2]{0}', space=sflag, size = 0x8, scoped, tag = 'scoped memory for tpu_custom_call.1']
    #allocation4 [shape = 's32[2]{0}', space=sflag, size = 0x8, scoped, tag = 'scoped memory for tpu_custom_call.1']
    #allocation5 [shape = 'u8[131072]{0}', space=vmem, size = 0x20000, scoped, tag = 'input window, operand 1']
    #allocation6 [shape = 's32[2]{0}', space=sflag, size = 0x8, scoped, tag = 'scoped memory for tpu_custom_call.1']
    #allocation7 [shape = 'u8[32768]{0}', space=vmem, size = 0x8000, scoped, tag = 'input window, operand 2, single buffered']
    #allocation8 [shape = 'u8[131072]{0}', space=vmem, size = 0x20000, scoped, tag = 'output window, operand 0']
    %9 = vsyncpa [#allocation3], 0
    %s10 = scalar_lea.sflag [#allocation3], 1
    %11 = vsyncpa %s10, 0
    %12 = vsyncpa [#allocation6], 0
    %s13 = scalar_lea.sflag [#allocation6], 1
    %14 = vsyncpa %s13, 0
    %15 = vsyncpa [#allocation4], 0
    %s16 = scalar_lea.sflag [#allocation4], 1
    %17 = vsyncpa %s16, 0
    loop: start=0, step=1, limit=4
    $region2: #{tpu_custom_call.1} parent=1 // loop_pre_header
      _
    $region3: #{tpu_custom_call.1} parent=1 // loop_header
      %s19 = sphi 0, %s23
      %p20 = scmp.ge.s32.totalorder %s19, 4
      %s29 = sphi 0, %s31
      %s32 = sphi 0, %s29
      %s33 = sphi 0, %s32
      %s49 = sphi 0, %s33
      %s55 = sphi 0, %s57
      %s58 = sphi 0, %s55
      %s59 = sphi 0, %s58
      %s75 = sphi 0, %s59
      %s79 = sphi 0, %s79
      %s81 = sphi 0, %s79
      %s82 = sphi 0, %s81
      %s96 = sphi 0, %s82
      %s100 = sphi 0, %s100
      %s102 = sphi 0, %s100
      %s103 = sphi 0, %s102
      %s117 = sphi 0, %s103
      %s123 = sphi 0, %s125
      %s126 = sphi 0, %s123
      %s127 = sphi 0, %s126
      %s143 = sphi 0, %s127
    $region4: #{tpu_custom_call.1} parent=1 // loop_header_branch
      %22 = sbr.rel (%p20) target = $region8
    $region5: #{tpu_custom_call.1} parent=1 // loop_body
      %s24 = ssub.s32 %s19, 1
      %s25 = ssub.s32 %s19, 2
      %s26 = sadd.s32 %s19, 1
      %s27 = ssub.s32 %s19, %s26
      %p28 = scmp.eq.s32.totalorder %s27, 0
      %s30 = sadd.s32 %s29, 1
      %s31 = scalar_select %p28, %s29, %s30
      %p34 = pneg %p28
      %p35 = scmp.eq.s32.totalorder %s19, 1
      %p36 = por %p34, %p35
      %p37 = scmp.ne.s32.totalorder %s29, %s32
      %p38 = scmp.eq.s32.totalorder %s19, 0
      %p39 = por %p37, %p38
      %p40 = scmp.ne.s32.totalorder %s29, %s32
      %p41 = scmp.eq.s32.totalorder %s24, 1
      %p42 = por %p40, %p41
      %p43 = scmp.ne.s32.totalorder %s32, %s33
      %p44 = scmp.eq.s32.totalorder %s24, 0
      %p45 = por %p43, %p44
      %p46 = scmp.ne.s32.totalorder %s32, %s33
      %p47 = scmp.eq.s32.totalorder %s25, 1
      %p48 = por %p46, %p47
      %p50 = scmp.ne.s32.totalorder %s33, %s49
      %p51 = scmp.eq.s32.totalorder %s25, 0
      %p52 = por %p50, %p51
      %s53 = ssub.s32 %s19, %s26
      %p54 = scmp.eq.s32.totalorder %s53, 0
      %s56 = sadd.s32 %s55, 1
      %s57 = scalar_select %p54, %s55, %s56
      %p60 = pneg %p54
      %p61 = scmp.eq.s32.totalorder %s19, 1
      %p62 = por %p60, %p61
      %p63 = scmp.ne.s32.totalorder %s55, %s58
      %p64 = scmp.eq.s32.totalorder %s19, 0
      %p65 = por %p63, %p64
      %p66 = scmp.ne.s32.totalorder %s55, %s58
      %p67 = scmp.eq.s32.totalorder %s24, 1
      %p68 = por %p66, %p67
      %p69 = scmp.ne.s32.totalorder %s58, %s59
      %p70 = scmp.eq.s32.totalorder %s24, 0
      %p71 = por %p69, %p70
      %p72 = scmp.ne.s32.totalorder %s58, %s59
      %p73 = scmp.eq.s32.totalorder %s25, 1
      %p74 = por %p72, %p73
      %p76 = scmp.ne.s32.totalorder %s59, %s75
      %p77 = scmp.eq.s32.totalorder %s25, 0
      %p78 = por %p76, %p77
      %s80 = sadd.s32 %s79, 1
      %p83 = scmp.eq.s32.totalorder %s19, 1
      %p84 = scmp.ne.s32.totalorder %s79, %s81
      %p85 = scmp.eq.s32.totalorder %s19, 0
      %p86 = por %p84, %p85
      %p87 = scmp.ne.s32.totalorder %s79, %s81
      %p88 = scmp.eq.s32.totalorder %s24, 1
      %p89 = por %p87, %p88
      %p90 = scmp.ne.s32.totalorder %s81, %s82
      %p91 = scmp.eq.s32.totalorder %s24, 0
      %p92 = por %p90, %p91
      %p93 = scmp.ne.s32.totalorder %s81, %s82
      %p94 = scmp.eq.s32.totalorder %s25, 1
      %p95 = por %p93, %p94
      %p97 = scmp.ne.s32.totalorder %s82, %s96
      %p98 = scmp.eq.s32.totalorder %s25, 0
      %p99 = por %p97, %p98
      %s101 = sadd.s32 %s100, 1
      %p104 = scmp.eq.s32.totalorder %s19, 1
      %p105 = scmp.ne.s32.totalorder %s100, %s102
      %p106 = scmp.eq.s32.totalorder %s19, 0
      %p107 = por %p105, %p106
      %p108 = scmp.ne.s32.totalorder %s100, %s102
      %p109 = scmp.eq.s32.totalorder %s24, 1
      %p110 = por %p108, %p109
      %p111 = scmp.ne.s32.totalorder %s102, %s103
      %p112 = scmp.eq.s32.totalorder %s24, 0
      %p113 = por %p111, %p112
      %p114 = scmp.ne.s32.totalorder %s102, %s103
      %p115 = scmp.eq.s32.totalorder %s25, 1
      %p116 = por %p114, %p115
      %p118 = scmp.ne.s32.totalorder %s103, %s117
      %p119 = scmp.eq.s32.totalorder %s25, 0
      %p120 = por %p118, %p119
      %s121 = ssub.s32 %s19, %s26
      %p122 = scmp.eq.s32.totalorder %s121, 0
      %s124 = sadd.s32 %s123, 1
      %s125 = scalar_select %p122, %s123, %s124
      %p128 = pneg %p122
      %p129 = scmp.eq.s32.totalorder %s19, 1
      %p130 = por %p128, %p129
      %p131 = scmp.ne.s32.totalorder %s123, %s126
      %p132 = scmp.eq.s32.totalorder %s19, 0
      %p133 = por %p131, %p132
      %p134 = scmp.ne.s32.totalorder %s123, %s126
      %p135 = scmp.eq.s32.totalorder %s24, 1
      %p136 = por %p134, %p135
      %p137 = scmp.ne.s32.totalorder %s126, %s127
      %p138 = scmp.eq.s32.totalorder %s24, 0
      %p139 = por %p137, %p138
      %p140 = scmp.ne.s32.totalorder %s126, %s127
      %p141 = scmp.eq.s32.totalorder %s25, 1
      %p142 = por %p140, %p141
      %p144 = scmp.ne.s32.totalorder %s127, %s143
      %p145 = scmp.eq.s32.totalorder %s25, 0
      %p146 = por %p144, %p145
      %p147 = scmp.le.s32.totalorder 1, %s19
      %p148 = scmp.lt.s32.totalorder %s19, 3
      %p149 = pnand %p147, %p148
      %p150 = pneg %p149
      // Predicated region
      $region9: #{tpu_custom_call.1} parent=5 // pred_check
        _
      $region10: #{tpu_custom_call.1} parent=5 // pred_check_branch
        %152 = sbr.rel (%p149) target = $region12
      $region11: #{tpu_custom_call.1} parent=5 // pred_region
        %s153 = ssub.s32 %s19, 1
        // Predicated region
        $region13: #{tpu_custom_call.1} parent=11 // pred_check
          %p154 = pneg %p92
        $region14: #{tpu_custom_call.1} parent=11 // pred_check_branch
          %156 = sbr.rel (%p154) target = $region16
        $region15: #{tpu_custom_call.1} parent=11 // pred_region
          %158 = vsyncadd [#allocation6], 0
          %s159 = sshll.u32 %s2, 4
          %s160 = int_to_ptr.hbm [resolvable:$true] %s159
          %s161 = sshll.u32 [#allocation7], 4
          %s162 = int_to_ptr.vmem [resolvable:$true] %s161
          %167 = dma.hbm_to_vmem [thread:$0]  %s160, 1024, %s162, [#allocation6], 64, 64, 4
        $region16: #{tpu_custom_call.1} parent=11 // pred_fallthru
          _
        // Predicated region
        $region17: #{tpu_custom_call.1} parent=11 // pred_check
          %p168 = pneg %p113
        $region18: #{tpu_custom_call.1} parent=11 // pred_check_branch
          %170 = sbr.rel (%p168) target = $region20
        $region19: #{tpu_custom_call.1} parent=11 // pred_region
          _
        $region20: #{tpu_custom_call.1} parent=11 // pred_fallthru
          _
      $region12: #{tpu_custom_call.1} parent=5 // pred_fallthru
        _
      %p171 = scmp.lt.s32.totalorder %s19, 2
      // Predicated region
      $region21: #{tpu_custom_call.1} parent=5 // pred_check
        %p172 = pneg %p171
      $region22: #{tpu_custom_call.1} parent=5 // pred_check_branch
        %174 = sbr.rel (%p172) target = $region24
      $region23: #{tpu_custom_call.1} parent=5 // pred_region
        // Predicated region
        $region25: #{tpu_custom_call.1} parent=23 // pred_check
          %p175 = pneg %p39
        $region26: #{tpu_custom_call.1} parent=23 // pred_check_branch
          %177 = sbr.rel (%p175) target = $region28
        $region27: #{tpu_custom_call.1} parent=23 // pred_region
          %s178 = sand.u32 %s29, 1
          %s179 = scalar_lea.sflag [#allocation3], %s178
          %s180 = sand.u32 %s29, 1
          %s181 = smul.addr %s180, 128
          %s182 = scalar_lea.vmem [#allocation2], %s181
          %s183 = smul.u32 16, %s19
          %185 = vsyncadd %s179, 0
          %s186 = smul.addr %s183, 8
          %s187 = scalar_lea.hbm %s0, %s186
          %s188 = sshll.u32 %s187, 4
          %s189 = int_to_ptr.hbm [resolvable:$true] %s188
          %s190 = sshll.u32 %s182, 4
          %s191 = int_to_ptr.vmem [resolvable:$true] %s190
          %196 = dma.hbm_to_vmem [thread:$0]  %s189, 2048, %s191, %s179, 128, 128, 8
        $region28: #{tpu_custom_call.1} parent=23 // pred_fallthru
          _
        // Predicated region
        $region29: #{tpu_custom_call.1} parent=23 // pred_check
          %p197 = pneg %p65
        $region30: #{tpu_custom_call.1} parent=23 // pred_check_branch
          %199 = sbr.rel (%p197) target = $region32
        $region31: #{tpu_custom_call.1} parent=23 // pred_region
          %s200 = sand.u32 %s19, 1
          %s201 = scalar_lea.sflag [#allocation6], %s200
          %s202 = sand.u32 %s55, 1
          %s203 = smul.addr %s202, 128
          %s204 = scalar_lea.vmem [#allocation5], %s203
          %s205 = smul.u32 16, %s19
          %207 = vsyncadd %s201, 0
          %s208 = smul.addr %s205, 8
          %s209 = scalar_lea.hbm %s1, %s208
          %s210 = sshll.u32 %s209, 4
          %s211 = int_to_ptr.hbm [resolvable:$true] %s210
          %s212 = sshll.u32 %s204, 4
          %s213 = int_to_ptr.vmem [resolvable:$true] %s212
          %218 = dma.hbm_to_vmem [thread:$0]  %s211, 2048, %s213, %s201, 128, 128, 8
        $region32: #{tpu_custom_call.1} parent=23 // pred_fallthru
          _
      $region24: #{tpu_custom_call.1} parent=5 // pred_fallthru
        _
      %p219 = scmp.le.s32.totalorder 1, %s19
      %p220 = scmp.lt.s32.totalorder %s19, 3
      %p221 = pnand %p219, %p220
      %p222 = pneg %p221
      // Predicated region
      $region33: #{tpu_custom_call.1} parent=5 // pred_check
        _
      $region34: #{tpu_custom_call.1} parent=5 // pred_check_branch
        %224 = sbr.rel (%p221) target = $region36
      $region35: #{tpu_custom_call.1} parent=5 // pred_region
        %s225 = ssub.s32 %s19, 1
        %s226 = sand.u32 %s32, 1
        %s227 = scalar_lea.sflag [#allocation3], %s226
        %s228 = sand.u32 %s32, 1
        %s229 = smul.addr %s228, 128
        %s230 = scalar_lea.vmem [#allocation2], %s229
        // Predicated region
        $region37: #{tpu_custom_call.1} parent=35 // pred_check
          %p231 = pneg %p45
        $region38: #{tpu_custom_call.1} parent=35 // pred_check_branch
          %233 = sbr.rel (%p231) target = $region40
        $region39: #{tpu_custom_call.1} parent=35 // pred_region
          %235 = dma.done %s227, 2048
        $region40: #{tpu_custom_call.1} parent=35 // pred_fallthru
          _
        %s236 = sand.u32 %s24, 1
        %s237 = scalar_lea.sflag [#allocation6], %s236
        %s238 = sand.u32 %s58, 1
        %s239 = smul.addr %s238, 128
        %s240 = scalar_lea.vmem [#allocation5], %s239
        // Predicated region
        $region41: #{tpu_custom_call.1} parent=35 // pred_check
          %p241 = pneg %p71
        $region42: #{tpu_custom_call.1} parent=35 // pred_check_branch
          %243 = sbr.rel (%p241) target = $region44
        $region43: #{tpu_custom_call.1} parent=35 // pred_region
          %245 = dma.done %s237, 2048
        $region44: #{tpu_custom_call.1} parent=35 // pred_fallthru
          _
        // Predicated region
        $region45: #{tpu_custom_call.1} parent=35 // pred_check
          %p246 = pneg %p92
        $region46: #{tpu_custom_call.1} parent=35 // pred_check_branch
          %248 = sbr.rel (%p246) target = $region48
        $region47: #{tpu_custom_call.1} parent=35 // pred_region
          %250 = dma.done [#allocation6], 1024
        $region48: #{tpu_custom_call.1} parent=35 // pred_fallthru
          _
        %s251 = sand.u32 %s32, 1
        %s252 = scalar_lea.sflag [#allocation3], %s251
        %s253 = sand.u32 %s32, 1
        %s254 = smul.addr %s253, 128
        %s255 = scalar_lea.vmem [#allocation2], %s254
        %p256 = pneg %p45
        %p257 = pneg %p42
        %s258 = sand.u32 %s24, 1
        %s259 = scalar_lea.sflag [#allocation6], %s258
        %s260 = sand.u32 %s58, 1
        %s261 = smul.addr %s260, 128
        %s262 = scalar_lea.vmem [#allocation5], %s261
        %p263 = pneg %p71
        %p264 = pneg %p68
        %p265 = pneg %p92
        %p266 = pneg %p89
        %p267 = pneg %p113
        %p268 = pneg %p110
        %p269 = pneg %p139
        %p270 = pneg %p136
        %s271 = sand.u32 %s126, 1
        %s272 = scalar_lea.sflag [#allocation4], %s271
        %s273 = sand.u32 %s126, 1
        %s274 = smul.addr %s273, 128
        %s275 = scalar_lea.vmem [#allocation8], %s274
        %s276 = smul.u32 16, %s24
        %s277 = smul.u32 16, %s24
        %s278 = smul.u32 16, %s24
        %v279 = vld [vmem:[%s240] sm:$0xff]
        %v280 = vld [vmem:[%s240 + $0x8] sm:$0xff]
        %v281 = vld [vmem:[%s240 + $0x10] sm:$0xff]
        %v282 = vld [vmem:[%s240 + $0x18] sm:$0xff]
        %v283 = vld [vmem:[%s240 + $0x20] sm:$0xff]
        %v284 = vld [vmem:[%s240 + $0x28] sm:$0xff]
        %v285 = vld [vmem:[%s240 + $0x30] sm:$0xff]
        %v286 = vld [vmem:[%s240 + $0x38] sm:$0xff]
        %v287 = vld [vmem:[%s240 + $0x40] sm:$0xff]
        %v288 = vld [vmem:[%s240 + $0x48] sm:$0xff]
        %v289 = vld [vmem:[%s240 + $0x50] sm:$0xff]
        %v290 = vld [vmem:[%s240 + $0x58] sm:$0xff]
        %v291 = vld [vmem:[%s240 + $0x60] sm:$0xff]
        %v292 = vld [vmem:[%s240 + $0x68] sm:$0xff]
        %v293 = vld [vmem:[%s240 + $0x70] sm:$0xff]
        %v294 = vld [vmem:[%s240 + $0x78] sm:$0xff]
        %v295 = vld [vmem:[%s230] sm:$0xff]
        %v296 = vld [vmem:[%s230 + $0x8] sm:$0xff]
        %v297 = vld [vmem:[%s230 + $0x10] sm:$0xff]
        %v298 = vld [vmem:[%s230 + $0x18] sm:$0xff]
        %v299 = vld [vmem:[%s230 + $0x20] sm:$0xff]
        %v300 = vld [vmem:[%s230 + $0x28] sm:$0xff]
        %v301 = vld [vmem:[%s230 + $0x30] sm:$0xff]
        %v302 = vld [vmem:[%s230 + $0x38] sm:$0xff]
        %v303 = vld [vmem:[%s230 + $0x40] sm:$0xff]
        %v304 = vld [vmem:[%s230 + $0x48] sm:$0xff]
        %v305 = vld [vmem:[%s230 + $0x50] sm:$0xff]
        %v306 = vld [vmem:[%s230 + $0x58] sm:$0xff]
        %v307 = vld [vmem:[%s230 + $0x60] sm:$0xff]
        %v308 = vld [vmem:[%s230 + $0x68] sm:$0xff]
        %v309 = vld [vmem:[%s230 + $0x70] sm:$0xff]
        %v310 = vld [vmem:[%s230 + $0x78] sm:$0xff]
        %v311 = vpack.c.bf16 %v280, %v279
        %v312 = vpack.c.bf16 %v282, %v281
        %v313 = vpack.c.bf16 %v284, %v283
        %v314 = vpack.c.bf16 %v286, %v285
        %v315 = vpack.c.bf16 %v288, %v287
        %v316 = vpack.c.bf16 %v290, %v289
        %v317 = vpack.c.bf16 %v292, %v291
        %v318 = vpack.c.bf16 %v294, %v293
        %v319 = vld [vmem:[#allocation7] sm:$0xf]
        %v320 = vld [vmem:[#allocation7 + $0x4] sm:$0xf]
        %v321 = vld [vmem:[#allocation7 + $0x8] sm:$0xf]
        %v322 = vld [vmem:[#allocation7 + $0xc] sm:$0xf]
        %v323 = vld [vmem:[#allocation7 + $0x10] sm:$0xf]
        %v324 = vld [vmem:[#allocation7 + $0x14] sm:$0xf]
        %v325 = vld [vmem:[#allocation7 + $0x18] sm:$0xf]
        %v326 = vld [vmem:[#allocation7 + $0x1c] sm:$0xf]
        %v327 = vld [vmem:[#allocation7 + $0x20] sm:$0xf]
        %v328 = vld [vmem:[#allocation7 + $0x24] sm:$0xf]
        %v329 = vld [vmem:[#allocation7 + $0x28] sm:$0xf]
        %v330 = vld [vmem:[#allocation7 + $0x2c] sm:$0xf]
        %v331 = vld [vmem:[#allocation7 + $0x30] sm:$0xf]
        %v332 = vld [vmem:[#allocation7 + $0x34] sm:$0xf]
        %v333 = vld [vmem:[#allocation7 + $0x38] sm:$0xf]
        %v334 = vld [vmem:[#allocation7 + $0x3c] sm:$0xf]
        %v335 = vld [vmem:[%s3] sm:$0x1]
        %v337 = vperm.slane %v335, 0
        %v355 = vunpack.c.l.b16 %v319
        %v356 = vunpack.c.l.b16 %v320
        %v357 = vunpack.c.l.b16 %v321
        %v358 = vunpack.c.l.b16 %v322
        %v359 = vunpack.c.l.b16 %v323
        %v360 = vunpack.c.l.b16 %v324
        %v361 = vunpack.c.l.b16 %v325
        %v362 = vunpack.c.l.b16 %v326
        %v363 = vunpack.c.l.b16 %v327
        %v364 = vunpack.c.l.b16 %v328
        %v365 = vunpack.c.l.b16 %v329
        %v366 = vunpack.c.l.b16 %v330
        %v367 = vunpack.c.l.b16 %v331
        %v368 = vunpack.c.l.b16 %v332
        %v369 = vunpack.c.l.b16 %v333
        %v370 = vunpack.c.l.b16 %v334
        %v371 = vpack.c.b16 %v356, %v355
        %v372 = vpack.c.b16 %v358, %v357
        %v373 = vpack.c.b16 %v360, %v359
        %v374 = vpack.c.b16 %v362, %v361
        %v375 = vpack.c.b16 %v364, %v363
        %v376 = vpack.c.b16 %v366, %v365
        %v377 = vpack.c.b16 %v368, %v367
        %v378 = vpack.c.b16 %v370, %v369
        %387 = vmatpush.bf16.msra.mxu0 %v378
        %388 = vmatpush.bf16.msra.mxu0 %v377
        %389 = vmatpush.bf16.msra.mxu0 %v376
        %390 = vmatpush.bf16.msra.mxu0 %v375
        %391 = vmatpush.bf16.msra.mxu0 %v374
        %392 = vmatpush.bf16.msra.mxu0 %v373
        %393 = vmatpush.bf16.msra.mxu0 %v372
        %394 = vmatpush.bf16.msra.mxu0 %v371
        %395 = vmatmul.bf16.gmra.mxu0 %v311
        %v396 = vpop.f32.mrf.mxu0
        %v397 = vadd.f32 %v337, %v396
        %v398 = vpop.f32.mrf.mxu0
        %v399 = vadd.f32 %v337, %v398
        %400 = vmatmul.bf16.gmra.mxu0 %v312
        %v401 = vpop.f32.mrf.mxu0
        %v402 = vadd.f32 %v337, %v401
        %v403 = vpop.f32.mrf.mxu0
        %v404 = vadd.f32 %v337, %v403
        %405 = vmatmul.bf16.gmra.mxu0 %v313
        %v406 = vpop.f32.mrf.mxu0
        %v407 = vadd.f32 %v337, %v406
        %v408 = vpop.f32.mrf.mxu0
        %v409 = vadd.f32 %v337, %v408
        %410 = vmatmul.bf16.gmra.mxu0 %v314
        %v411 = vpop.f32.mrf.mxu0
        %v412 = vadd.f32 %v337, %v411
        %v413 = vpop.f32.mrf.mxu0
        %v414 = vadd.f32 %v337, %v413
        %415 = vmatmul.bf16.gmra.mxu0 %v315
        %v416 = vpop.f32.mrf.mxu0
        %v417 = vadd.f32 %v337, %v416
        %v418 = vpop.f32.mrf.mxu0
        %v419 = vadd.f32 %v337, %v418
        %420 = vmatmul.bf16.gmra.mxu0 %v316
        %v421 = vpop.f32.mrf.mxu0
        %v422 = vadd.f32 %v337, %v421
        %v423 = vpop.f32.mrf.mxu0
        %v424 = vadd.f32 %v337, %v423
        %425 = vmatmul.bf16.gmra.mxu0 %v317
        %v426 = vpop.f32.mrf.mxu0
        %v427 = vadd.f32 %v337, %v426
        %v428 = vpop.f32.mrf.mxu0
        %v429 = vadd.f32 %v337, %v428
        %430 = vmatmul.bf16.gmra.mxu0 %v318
        %v431 = vpop.f32.mrf.mxu0
        %v432 = vadd.f32 %v337, %v431
        %v433 = vpop.f32.mrf.mxu0
        %v434 = vadd.f32 %v337, %v433
        %435 = vdwg.mxu0
        %v436 = vmul.f32 %v295, %v397
        %v437 = vmul.f32 %v296, %v399
        %v438 = vmul.f32 %v297, %v402
        %v439 = vmul.f32 %v298, %v404
        %v440 = vmul.f32 %v299, %v407
        %v441 = vmul.f32 %v300, %v409
        %v442 = vmul.f32 %v301, %v412
        %v443 = vmul.f32 %v302, %v414
        %v444 = vmul.f32 %v303, %v417
        %v445 = vmul.f32 %v304, %v419
        %v446 = vmul.f32 %v305, %v422
        %v447 = vmul.f32 %v306, %v424
        %v448 = vmul.f32 %v307, %v427
        %v449 = vmul.f32 %v308, %v429
        %v450 = vmul.f32 %v309, %v432
        %v451 = vmul.f32 %v310, %v434
        %v452 = vadd.f32 %v436, %v279
        %v453 = vadd.f32 %v437, %v280
        %v454 = vadd.f32 %v438, %v281
        %v455 = vadd.f32 %v439, %v282
        %v456 = vadd.f32 %v440, %v283
        %v457 = vadd.f32 %v441, %v284
        %v458 = vadd.f32 %v442, %v285
        %v459 = vadd.f32 %v443, %v286
        %v460 = vadd.f32 %v444, %v287
        %v461 = vadd.f32 %v445, %v288
        %v462 = vadd.f32 %v446, %v289
        %v463 = vadd.f32 %v447, %v290
        %v464 = vadd.f32 %v448, %v291
        %v465 = vadd.f32 %v449, %v292
        %v466 = vadd.f32 %v450, %v293
        %v467 = vadd.f32 %v451, %v294
        %468 = vst [vmem:[%s275] sm:$0xff] %v452
        %469 = vst [vmem:[%s275 + $0x8] sm:$0xff] %v453
        %470 = vst [vmem:[%s275 + $0x10] sm:$0xff] %v454
        %471 = vst [vmem:[%s275 + $0x18] sm:$0xff] %v455
        %472 = vst [vmem:[%s275 + $0x20] sm:$0xff] %v456
        %473 = vst [vmem:[%s275 + $0x28] sm:$0xff] %v457
        %474 = vst [vmem:[%s275 + $0x30] sm:$0xff] %v458
        %475 = vst [vmem:[%s275 + $0x38] sm:$0xff] %v459
        %476 = vst [vmem:[%s275 + $0x40] sm:$0xff] %v460
        %477 = vst [vmem:[%s275 + $0x48] sm:$0xff] %v461
        %478 = vst [vmem:[%s275 + $0x50] sm:$0xff] %v462
        %479 = vst [vmem:[%s275 + $0x58] sm:$0xff] %v463
        %480 = vst [vmem:[%s275 + $0x60] sm:$0xff] %v464
        %481 = vst [vmem:[%s275 + $0x68] sm:$0xff] %v465
        %482 = vst [vmem:[%s275 + $0x70] sm:$0xff] %v466
        %483 = vst [vmem:[%s275 + $0x78] sm:$0xff] %v467
        %s484 = sand.u32 %s126, 1
        %s485 = scalar_lea.sflag [#allocation4], %s484
        %s486 = sand.u32 %s126, 1
        %s487 = smul.addr %s486, 128
        %s488 = scalar_lea.vmem [#allocation8], %s487
        // Predicated region
        $region49: #{tpu_custom_call.1} parent=35 // pred_check
          %p489 = pneg %p136
        $region50: #{tpu_custom_call.1} parent=35 // pred_check_branch
          %491 = sbr.rel (%p489) target = $region52
        $region51: #{tpu_custom_call.1} parent=35 // pred_region
          %s492 = smul.u32 16, %s24
          %494 = vsyncadd %s485, 0
          %s495 = smul.addr %s492, 8
          %s496 = scalar_lea.hbm %s4, %s495
          %s497 = sshll.u32 %s488, 4
          %s498 = int_to_ptr.vmem [resolvable:$true] %s497
          %s499 = sshll.u32 %s496, 4
          %s500 = int_to_ptr.hbm [resolvable:$true] %s499
          %505 = dma.vmem_to_hbm [thread:$0]  %s498, 2048, %s500, %s485, 128, 128, 8
        $region52: #{tpu_custom_call.1} parent=35 // pred_fallthru
          _
      $region36: #{tpu_custom_call.1} parent=5 // pred_fallthru
        _
      %p506 = scmp.le.s32.totalorder 2, %s19
      // Predicated region
      $region53: #{tpu_custom_call.1} parent=5 // pred_check
        %p507 = pneg %p506
      $region54: #{tpu_custom_call.1} parent=5 // pred_check_branch
        %509 = sbr.rel (%p507) target = $region56
      $region55: #{tpu_custom_call.1} parent=5 // pred_region
        %s510 = ssub.s32 %s19, 2
        // Predicated region
        $region57: #{tpu_custom_call.1} parent=55 // pred_check
          %p511 = pneg %p142
        $region58: #{tpu_custom_call.1} parent=55 // pred_check_branch
          %513 = sbr.rel (%p511) target = $region60
        $region59: #{tpu_custom_call.1} parent=55 // pred_region
          %s514 = sand.u32 %s127, 1
          %s515 = scalar_lea.sflag [#allocation4], %s514
          %s516 = sand.u32 %s127, 1
          %s517 = smul.addr %s516, 128
          %s518 = scalar_lea.vmem [#allocation8], %s517
          %520 = dma.done %s515, 2048
        $region60: #{tpu_custom_call.1} parent=55 // pred_fallthru
          _
      $region56: #{tpu_custom_call.1} parent=5 // pred_fallthru
        _
    $region6: #{tpu_custom_call.1} parent=1 // loop_footer
      %s23 = sadd.s32 1, %s19
    $region7: #{tpu_custom_call.1} parent=1 // loop_footer_branch
      %18 = sbr.rel target = $region3
    $region8: #{tpu_custom_call.1} parent=1 // loop_exit
      _
    %521 = vsyncpa [#allocation3], 1
    %s522 = scalar_lea.sflag [#allocation3], 1
    %523 = vsyncpa %s522, 1
    %524 = vsyncpa [#allocation6], 1
    %s525 = scalar_lea.sflag [#allocation6], 1
    %526 = vsyncpa %s525, 1
    %527 = vsyncpa [#allocation4], 1
    %s528 = scalar_lea.sflag [#allocation4], 1
    %529 = vsyncpa %s528, 1

</llo_original>
